<compile_context>
chip_gen: v6e
topology: v6e:2x2x1
jax: 0.10.0
libtpu: 0.0.40
codegen_flags: <defaults>
</compile_context>

<pallas_src>
import functools

import jax
import jax.numpy as jnp
from jax import lax
from jax.experimental import pallas as pl
from jax.experimental.pallas import tpu as pltpu


def _round_up(x, m):
    return ((x + m - 1) // m) * m


def _ls_ce_kernel(tgt_ref, lp_ref, nll_ref, sm_ref, *,
                  ignore_index, n_rows, vocab, tile_n, tile_v,
                  mask_rows, mask_cols):
    """Grid step (i, j): rows [i*tile_n, ...) x vocab slab [j*tile_v, ...)."""
    i = pl.program_id(0)   # row-tile index
    j = pl.program_id(1)   # vocab-tile index (innermost reduction axis)

    @pl.when((i == 0) & (j == 0))
    def _():
        nll_ref[...] = jnp.zeros_like(nll_ref)
        sm_ref[...] = jnp.zeros_like(sm_ref)

    lp = lp_ref[...].astype(jnp.float32)      # (tile_n, tile_v), f32 accumulate
    tgt = tgt_ref[...]                        # (tile_n, 1) int32

    col = lax.broadcasted_iota(jnp.int32, (tile_n, tile_v), 1)  # lane index

    # Row validity mask: tail rows past N and ignore_index (pad) rows.
    row_keep = None
    if mask_rows:
        row = lax.broadcasted_iota(jnp.int32, (tile_n, 1), 0)
        row_keep = row < (n_rows - i * tile_n)
    if ignore_index is not None:
        not_pad = tgt != ignore_index
        row_keep = not_pad if row_keep is None else (row_keep & not_pad)

    # gather(dim=-1, index=target): exactly one lane per row matches the
    # vocab-tile-local target id.
    is_tgt = col == (tgt - j * tile_v)        # (tile_n, tile_v) bool
    if row_keep is not None:
        is_tgt = is_tgt & row_keep

    # smooth term: sum of all valid log-probs in this block.
    keep = row_keep
    if mask_cols:
        col_keep = col < (vocab - j * tile_v)
        keep = col_keep if keep is None else (keep & col_keep)

    if keep is None:
        sm_part = jnp.sum(lp)
    else:
        sm_part = jnp.sum(jnp.where(keep, lp, 0.0))
    nll_part = jnp.sum(jnp.where(is_tgt, lp, 0.0))

    # Running scalar sums (output block fixed at (0,0) -> resident all grid).
    nll_ref[...] += -nll_part
    sm_ref[...] += -sm_part


def _choose_tiles(n_rows, vocab, itemsize, block_bytes):
    """Pick (tile_n, tile_v): lane-dense vocab slab, ~block_bytes lprobs blocks."""
    if vocab % 128 == 0:
        tile_v = min(vocab, 8192)
    elif vocab <= 8192:
        tile_v = vocab                 # full last dim is always a legal block
    else:
        tile_v = 8192                  # tail masked in-kernel
    # Rows: multiple of 8, sized so one lprobs block is ~block_bytes; capped at
    # 2048 so the lane-padded (tile_n, 1) target block stays small in VMEM.
    rows = max(8, (block_bytes // (tile_v * itemsize)) // 8 * 8)
    tile_n = int(min(_round_up(max(n_rows, 1), 8), rows, 2048))
    return tile_n, tile_v


def label_smoothed_cross_entropy(lprobs, target, *, smoothing, ignore_index=None,
                                 tile_n=None, tile_v=None,
                                 block_bytes=8 * 1024 * 1024):
    """Pallas implementation of the module's forward with reduce=True."""
    vocab = lprobs.shape[-1]
    # Stream lprobs in native dtype (bf16 stays bf16 in HBM); no wrapper upcast.
    lp2 = lprobs.reshape(-1, vocab)
    tgt2 = target.reshape(-1, 1).astype(jnp.int32)
    n = lp2.shape[0]
    itemsize = jnp.dtype(lp2.dtype).itemsize

    auto_n, auto_v = _choose_tiles(n, vocab, itemsize, block_bytes)
    tile_n = auto_n if tile_n is None else tile_n
    tile_v = auto_v if tile_v is None else tile_v

    grid = (pl.cdiv(n, tile_n), pl.cdiv(vocab, tile_v))
    mask_rows = (n % tile_n) != 0
    mask_cols = (vocab % tile_v) != 0

    kernel = functools.partial(
        _ls_ce_kernel, ignore_index=ignore_index, n_rows=n, vocab=vocab,
        tile_n=tile_n, tile_v=tile_v, mask_rows=mask_rows, mask_cols=mask_cols)

    # Explicit VMEM budget: double-buffered lprobs blocks + lane-padded targets
    # + small accumulators; clamped to stay inside v7x's 64 MiB physical VMEM.
    lp_block = tile_n * tile_v * itemsize
    tgt_block = tile_n * 128 * 4          # (tile_n, 1) int32 lane-padded to 128
    vmem_bytes = 2 * (lp_block + tgt_block) + (2 << 20)
    vmem_limit = int(min(max(vmem_bytes, 16 * 1024 * 1024), 48 * 1024 * 1024))

    nll_sum, sm_sum = pl.pallas_call(
        kernel,
        out_shape=(jax.ShapeDtypeStruct((1, 1), jnp.float32),
                   jax.ShapeDtypeStruct((1, 1), jnp.float32)),
        grid_spec=pltpu.PrefetchScalarGridSpec(
            num_scalar_prefetch=0,
            grid=grid,
            in_specs=[
                pl.BlockSpec((tile_n, 1), lambda i, j: (i, 0)),        # targets
                pl.BlockSpec((tile_n, tile_v), lambda i, j: (i, j)),   # log-probs
            ],
            out_specs=[
                pl.BlockSpec((1, 1), lambda i, j: (0, 0)),             # nll acc
                pl.BlockSpec((1, 1), lambda i, j: (0, 0)),             # smooth acc
            ],
        ),
        compiler_params=pltpu.CompilerParams(
            dimension_semantics=("arbitrary", "arbitrary"),
            vmem_limit_bytes=vmem_limit),
    )(tgt2, lp2)

    eps_i = smoothing / vocab
    loss = (1.0 - smoothing) * nll_sum[0, 0] + eps_i * sm_sum[0, 0]
    return loss


def _reference(lprobs, target, smoothing, ignore_index):
    """Pure-JAX reference mirroring the PyTorch module (reduce=True)."""
    v = lprobs.shape[-1]
    lp2 = lprobs.reshape(-1, v).astype(jnp.float32)
    tgt = target.reshape(-1)
    nll = -jnp.take_along_axis(lp2, tgt[:, None], axis=-1)[:, 0]
    smooth = -jnp.sum(lp2, axis=-1)
    if ignore_index is not None:
        pad = tgt == ignore_index
        nll = jnp.where(pad, 0.0, nll)
        smooth = jnp.where(pad, 0.0, smooth)
    return (1.0 - smoothing) * jnp.sum(nll) + (smoothing / v) * jnp.sum(smooth)


if __name__ == "__main__":
    SMOOTHING = 0.1
    key = jax.random.PRNGKey(0)

    # Case 1: f32 lprobs, vocab a multiple of 128, ignore_index padding.
    B, S, V = 2, 8, 128
    IGNORE_INDEX = 1  # e.g. pad token id
    k1, k2, k3, key = jax.random.split(key, 4)
    logits = jax.random.normal(k1, (B, S, V), dtype=jnp.float32)
    lprobs = jax.nn.log_softmax(logits, axis=-1)
    target = jax.random.randint(k2, (B, S), 0, V, dtype=jnp.int32)
    pad_mask = jax.random.bernoulli(k3, 0.25, (B, S))
    target = jnp.where(pad_mask, IGNORE_INDEX, target)

    loss = label_smoothed_cross_entropy(
        lprobs, target, smoothing=SMOOTHING, ignore_index=IGNORE_INDEX)
    loss = jax.block_until_ready(loss)
    ref = _reference(lprobs, target, SMOOTHING, IGNORE_INDEX)
    assert jnp.allclose(loss, ref, rtol=1e-5, atol=1e-4), (loss, ref)

    # Case 2: bf16 lprobs, ragged shapes (row tail + non-128 vocab), no pad id.
    B2, S2, V2 = 2, 37, 160
    k4, k5, key = jax.random.split(key, 3)
    logits2 = jax.random.normal(k4, (B2, S2, V2), dtype=jnp.float32)
    lprobs2 = jax.nn.log_softmax(logits2, axis=-1).astype(jnp.bfloat16)
    target2 = jax.random.randint(k5, (B2, S2), 0, V2, dtype=jnp.int32)

    loss2 = label_smoothed_cross_entropy(
        lprobs2, target2, smoothing=SMOOTHING, ignore_index=None)
    loss2 = jax.block_until_ready(loss2)
    ref2 = _reference(lprobs2, target2, SMOOTHING, None)
    assert jnp.allclose(loss2, ref2, rtol=2e-3, atol=2e-3), (loss2, ref2)

    print("KERNEL_OK")
</pallas_src>

<mosaic_0001>
module attributes {stable_mosaic.version = 11 : i64} {
  func.func @_ls_ce_kernel(%arg0: i32, %arg1: i32, %arg2: memref<16x1xi32, #tpu.memory_space<vmem>>, %arg3: memref<16x128xf32, #tpu.memory_space<vmem>>, %arg4: memref<1x1xf32, #tpu.memory_space<vmem>>, %arg5: memref<1x1xf32, #tpu.memory_space<vmem>>) attributes {dimension_semantics = [#tpu.dimension_semantics<arbitrary>, #tpu.dimension_semantics<arbitrary>], iteration_bounds = array<i64: 1, 1>, scalar_prefetch = 0 : i64, scratch_operands = 0 : i64, tpu.core_type = #tpu.core_type<tc>, window_params = [{transform_indices = @transform_0, window_bounds = array<i64: 16, 1>}, {transform_indices = @transform_1, window_bounds = array<i64: 16, 128>}, {pipeline_mode = #tpu.pipeline_mode<synchronous>, transform_indices = @transform_2, window_bounds = array<i64: 1, 1>}, {pipeline_mode = #tpu.pipeline_mode<synchronous>, transform_indices = @transform_3, window_bounds = array<i64: 1, 1>}]} {
    %c0_i32 = arith.constant 0 : i32
    %0 = arith.cmpi eq, %arg0, %c0_i32 : i32
    %c0_i32_0 = arith.constant 0 : i32
    %1 = arith.cmpi eq, %arg1, %c0_i32_0 : i32
    %2 = arith.andi %0, %1 : i1
    %3 = arith.extui %2 : i1 to i32
    %c0_i32_1 = arith.constant 0 : i32
    %4 = arith.cmpi ne, %3, %c0_i32_1 : i32
    scf.if %4 {
      %cst_18 = arith.constant 0.000000e+00 : f32
      %41 = vector.broadcast %cst_18 : f32 to vector<1x1xf32>
      %c0_19 = arith.constant 0 : index
      %c0_20 = arith.constant 0 : index
      %42 = vector.load %arg4[%c0_19, %c0_20] : memref<1x1xf32, #tpu.memory_space<vmem>>, vector<1x1xf32>
      tpu.vector_store %arg4[%c0_19, %c0_20], %41 {strides = array<i32>} : memref<1x1xf32, #tpu.memory_space<vmem>>, vector<1x1xf32>,
      %cst_21 = arith.constant 0.000000e+00 : f32
      %43 = vector.broadcast %cst_21 : f32 to vector<1x1xf32>
      %c0_22 = arith.constant 0 : index
      %c0_23 = arith.constant 0 : index
      %44 = vector.load %arg5[%c0_22, %c0_23] : memref<1x1xf32, #tpu.memory_space<vmem>>, vector<1x1xf32>
      tpu.vector_store %arg5[%c0_22, %c0_23], %43 {strides = array<i32>} : memref<1x1xf32, #tpu.memory_space<vmem>>, vector<1x1xf32>,
    } else {
    }
    %c0 = arith.constant 0 : index
    %c0_2 = arith.constant 0 : index
    %5 = vector.load %arg3[%c0, %c0_2] : memref<16x128xf32, #tpu.memory_space<vmem>>, vector<16x128xf32>
    %c0_3 = arith.constant 0 : index
    %c0_4 = arith.constant 0 : index
    %6 = vector.load %arg2[%c0_3, %c0_4] : memref<16x1xi32, #tpu.memory_space<vmem>>, vector<16x1xi32>
    %7 = tpu.iota {dimensions = array<i32: 1>} : vector<16x128xi32>
    %c1_i32 = arith.constant 1 : i32
    %8 = vector.broadcast %c1_i32 : i32 to vector<16x1xi32>
    %9 = arith.cmpi ne, %6, %8 : vector<16x1xi32>
    %c128_i32 = arith.constant 128 : i32
    %10 = arith.muli %arg1, %c128_i32 : i32
    %11 = vector.broadcast %10 : i32 to vector<16x1xi32>
    %12 = arith.subi %6, %11 : vector<16x1xi32>
    %13 = vector.broadcast %12 : vector<16x1xi32> to vector<16x128xi32>
    %14 = arith.cmpi eq, %7, %13 : vector<16x128xi32>
    %15 = vector.broadcast %9 : vector<16x1xi1> to vector<16x128xi1>
    %16 = arith.andi %14, %15 : vector<16x128xi1>
    %cst = arith.constant 0.000000e+00 : f32
    %17 = vector.shape_cast %9 : vector<16x1xi1> to vector<16x1xi1>
    %18 = vector.broadcast %17 : vector<16x1xi1> to vector<16x128xi1>
    %19 = vector.broadcast %cst : f32 to vector<16x128xf32>
    %20 = arith.select %18, %5, %19 : vector<16x128xi1>, vector<16x128xf32>
    %21 = vector.shape_cast %20 : vector<16x128xf32> to vector<1x16x128xf32>
    %cst_5 = arith.constant dense<0.000000e+00> : vector<1xf32>
    %22 = vector.multi_reduction <add>, %21, %cst_5 [1, 2] : vector<1x16x128xf32> to vector<1xf32>
    %23 = vector.shape_cast %22 : vector<1xf32> to vector<1x1x1xf32>
    %24 = vector.extract %23[0, 0, 0] : f32 from vector<1x1x1xf32>
    %cst_6 = arith.constant 0.000000e+00 : f32
    %25 = vector.broadcast %cst_6 : f32 to vector<16x128xf32>
    %26 = arith.select %16, %5, %25 : vector<16x128xi1>, vector<16x128xf32>
    %27 = vector.shape_cast %26 : vector<16x128xf32> to vector<1x16x128xf32>
    %cst_7 = arith.constant dense<0.000000e+00> : vector<1xf32>
    %28 = vector.multi_reduction <add>, %27, %cst_7 [1, 2] : vector<1x16x128xf32> to vector<1xf32>
    %29 = vector.shape_cast %28 : vector<1xf32> to vector<1x1x1xf32>
    %30 = vector.extract %29[0, 0, 0] : f32 from vector<1x1x1xf32>
    %c0_8 = arith.constant 0 : index
    %c0_9 = arith.constant 0 : index
    %31 = vector.load %arg4[%c0_8, %c0_9] : memref<1x1xf32, #tpu.memory_space<vmem>>, vector<1x1xf32>
    %cst_10 = arith.constant 0.000000e+00 : f32
    %32 = arith.subf %cst_10, %30 : f32
    %33 = vector.broadcast %32 : f32 to vector<1x1xf32>
    %34 = arith.addf %31, %33 : vector<1x1xf32>
    %c0_11 = arith.constant 0 : index
    %c0_12 = arith.constant 0 : index
    %35 = vector.load %arg4[%c0_11, %c0_12] : memref<1x1xf32, #tpu.memory_space<vmem>>, vector<1x1xf32>
    tpu.vector_store %arg4[%c0_11, %c0_12], %34 {strides = array<i32>} : memref<1x1xf32, #tpu.memory_space<vmem>>, vector<1x1xf32>,
    %c0_13 = arith.constant 0 : index
    %c0_14 = arith.constant 0 : index
    %36 = vector.load %arg5[%c0_13, %c0_14] : memref<1x1xf32, #tpu.memory_space<vmem>>, vector<1x1xf32>
    %cst_15 = arith.constant 0.000000e+00 : f32
    %37 = arith.subf %cst_15, %24 : f32
    %38 = vector.broadcast %37 : f32 to vector<1x1xf32>
    %39 = arith.addf %36, %38 : vector<1x1xf32>
    %c0_16 = arith.constant 0 : index
    %c0_17 = arith.constant 0 : index
    %40 = vector.load %arg5[%c0_16, %c0_17] : memref<1x1xf32, #tpu.memory_space<vmem>>, vector<1x1xf32>
    tpu.vector_store %arg5[%c0_16, %c0_17], %39 {strides = array<i32>} : memref<1x1xf32, #tpu.memory_space<vmem>>, vector<1x1xf32>,
    return
  }
  func.func @transform_0(%arg0: i32, %arg1: i32) -> (i32, i32) {
    %c0_i32 = arith.constant 0 : i32
    %c0_i32_0 = arith.constant 0 : i32
    return %arg0, %c0_i32 : i32, i32
  }
  func.func @transform_1(%arg0: i32, %arg1: i32) -> (i32, i32) {
    %c0_i32 = arith.constant 0 : i32
    return %arg0, %arg1 : i32, i32
  }
  func.func @transform_2(%arg0: i32, %arg1: i32) -> (i32, i32) {
    %c0_i32 = arith.constant 0 : i32
    %c0_i32_0 = arith.constant 0 : i32
    %c0_i32_1 = arith.constant 0 : i32
    return %c0_i32, %c0_i32_0 : i32, i32
  }
  func.func @transform_3(%arg0: i32, %arg1: i32) -> (i32, i32) {
    %c0_i32 = arith.constant 0 : i32
    %c0_i32_0 = arith.constant 0 : i32
    %c0_i32_1 = arith.constant 0 : i32
    return %c0_i32, %c0_i32_0 : i32, i32
  }
}

</mosaic_0001>

<llo_original>
// kernel: tpu_custom_call.1
$region0: #{tpu_custom_call.1}
  #allocation0 [shape = 'u32[]', space=smem, size = 0x4, offset = 0x4, fixed_abs, tag = 'smem constant byte address 0x4 - core index']
  #allocation1 [shape = 'u32[144,128]{1,0:T(1,128)}', space=vmem, size = 0x12000, scoped, tag = 'internal scratch']
  %s0 = inlined_call_operand.vmem [shape: s32[16,1], index: 0, kind: input, shape index: {}]
  %s1 = inlined_call_operand.vmem [shape: f32[16,128], index: 1, kind: input, shape index: {}]
  %s2 = inlined_call_operand.hbm [shape: f32[1,1], index: 2, kind: output, shape index: {0}]
  %s3 = inlined_call_operand.hbm [shape: f32[1,1], index: 3, kind: output, shape index: {1}]
  %4 = xla_tuple %s2, %s3
  %s5 = sld [smem:[#allocation0]]
  $region30: #{tpu_custom_call.1} parent=0
    _
  %s7 = ssub.s32 1, %s5
  %s8 = scalar_select 0, %s7, %s5
  $region1: #{tpu_custom_call.1} parent=0
    #allocation2 [shape = 'u8[512]{0}', space=vmem, size = 0x400, scoped, tag = 'output window, operand 0, single buffered']
    #allocation3 [shape = 's32[1]{0}', space=sflag, size = 0x4, scoped, tag = 'scoped memory for tpu_custom_call.1']
    #allocation4 [shape = 'u8[512]{0}', space=vmem, size = 0x400, scoped, tag = 'output window, operand 1, single buffered']
    #allocation5 [shape = 's32[1]{0}', space=sflag, size = 0x4, scoped, tag = 'scoped memory for tpu_custom_call.1']
    %9 = vsyncpa [#allocation3], 0
    %10 = vsyncpa [#allocation5], 0
    // Predicated region
    $region2: #{tpu_custom_call.1} parent=1 // pred_check
      _
    $region3: #{tpu_custom_call.1} parent=1 // pred_check_branch
      %12 = sbr.rel (0) target = $region5
    $region4: #{tpu_custom_call.1} parent=1 // pred_region
      _
    $region5: #{tpu_custom_call.1} parent=1 // pred_fallthru
      _
    // Predicated region
    $region6: #{tpu_custom_call.1} parent=1 // pred_check
      _
    $region7: #{tpu_custom_call.1} parent=1 // pred_check_branch
      %14 = sbr.rel (0) target = $region9
    $region8: #{tpu_custom_call.1} parent=1 // pred_region
      _
    $region9: #{tpu_custom_call.1} parent=1 // pred_fallthru
      _
    %p15 = scmp.eq.s32.totalorder 0, 0
    %p16 = scmp.eq.s32.totalorder 0, 0
    %p17 = pnand %p15, %p16
    %p18 = pneg %p17
    // Predicated region
    $region10: #{tpu_custom_call.1} parent=1 // pred_check
      _
    $region11: #{tpu_custom_call.1} parent=1 // pred_check_branch
      %20 = sbr.rel (%p17) target = $region13
    $region12: #{tpu_custom_call.1} parent=1 // pred_region
      %vm21 = vcmask 0
      %22 = vst.msk [vmem:[#allocation2] sm:$0x1] %vm21, 0.0
      %23 = vst.msk [vmem:[#allocation4] sm:$0x1] %vm21, 0.0
    $region13: #{tpu_custom_call.1} parent=1 // pred_fallthru
      _
    %v24 = vld [vmem:[%s1] sm:$0xff]
    %v25 = vld [vmem:[%s1 + $0x8] sm:$0xff]
    %v26 = vld [vmem:[%s0] sm:$0xff]
    %v27 = vld [vmem:[%s0 + $0x8] sm:$0xff]
    %v28 = vlaneseq
    %v29 = vand.u32 %v28, 127
    %vm30 = vcmp.ne.s32.totalorder %v26, 1
    %vm31 = vcmp.ne.s32.totalorder %v27, 1
    %s32 = smul.u32 0, 128
    %v33 = vstv %s32
    %v34 = vsub.s32 %v26, %v33
    %v35 = vsub.s32 %v27, %v33
    %36 = vset.pattern.permute.xlu0 0
    %37 = vperm.xlu0 %36, %v34
    %v38 = vpop.permute.xlu0 %37
    %39 = vset.pattern.permute.xlu0 0
    %40 = vperm.xlu0 %39, %v35
    %v41 = vpop.permute.xlu0 %40
    %vm42 = vcmp.eq.s32.totalorder %v29, %v38
    %vm43 = vcmp.eq.s32.totalorder %v29, %v41
    %v44 = vsel %vm30, 1, 0
    %v45 = vsel %vm31, 1, 0
    %46 = vset.pattern.permute.xlu0 0
    %47 = vperm.xlu0 %46, %v44
    %v48 = vpop.permute.xlu0 %47
    %49 = vset.pattern.permute.xlu0 0
    %50 = vperm.xlu0 %49, %v45
    %v51 = vpop.permute.xlu0 %50
    %vm52 = vcmp.eq.s32.totalorder %v48, 1
    %vm53 = vcmp.eq.s32.totalorder %v51, 1
    %vm54 = vmand %vm42, %vm52
    %vm55 = vmand %vm43, %vm53
    %v56 = vsel %vm52, %v24, 0.0
    %v57 = vsel %vm53, %v25, 0.0
    %v58 = vadd.f32 %v56, %v57
    %59 = vadd.xlane.f32.xlu0 %v58
    %v60 = vpop.xlane.xlu0 %59
    %v61 = vrot.slane %v60, 4
    %v62 = vadd.f32 %v60, %v61
    %v63 = vrot.slane %v62, 2
    %v64 = vadd.f32 %v62, %v63
    %v65 = vrot.slane %v64, 1
    %v66 = vadd.f32 %v64, %v65
    %s67 = vtos %v66
    %v68 = vsel %vm54, %v24, 0.0
    %v69 = vsel %vm55, %v25, 0.0
    %v70 = vadd.f32 %v68, %v69
    %71 = vadd.xlane.f32.xlu0 %v70
    %v72 = vpop.xlane.xlu0 %71
    %v73 = vrot.slane %v72, 4
    %v74 = vadd.f32 %v72, %v73
    %v75 = vrot.slane %v74, 2
    %v76 = vadd.f32 %v74, %v75
    %v77 = vrot.slane %v76, 1
    %v78 = vadd.f32 %v76, %v77
    %s79 = vtos %v78
    %v80 = vld [vmem:[#allocation2] sm:$0x1]
    %s81 = ssub.f32 0.0, %s79
    %v82 = vstv %s81
    %v83 = vadd.f32 %v80, %v82
    %vm84 = vcmask 0
    %85 = vst.msk [vmem:[#allocation2] sm:$0x1] %vm84, %v83
    %v86 = vld [vmem:[#allocation4] sm:$0x1]
    %s87 = ssub.f32 0.0, %s67
    %v88 = vstv %s87
    %v89 = vadd.f32 %v86, %v88
    %90 = vst.msk [vmem:[#allocation4] sm:$0x1] %vm84, %v89
    // Predicated region
    $region14: #{tpu_custom_call.1} parent=1 // pred_check
      _
    $region15: #{tpu_custom_call.1} parent=1 // pred_check_branch
      %92 = sbr.rel (0) target = $region17
    $region16: #{tpu_custom_call.1} parent=1 // pred_region
      %s94 = ssub.s32 16, 16
      %95 = vsyncadd [#allocation3], %s94
      %s97 = sshll.u32 [#allocation2], 4
      %s98 = int_to_ptr.vmem [resolvable:$true] %s97
      %100 = dma.vmem_to_hbm [thread:$0]  %s98, 16, %s2, [#allocation3]
    $region17: #{tpu_custom_call.1} parent=1 // pred_fallthru
      _
    // Predicated region
    $region18: #{tpu_custom_call.1} parent=1 // pred_check
      _
    $region19: #{tpu_custom_call.1} parent=1 // pred_check_branch
      %102 = sbr.rel (0) target = $region21
    $region20: #{tpu_custom_call.1} parent=1 // pred_region
      %s104 = ssub.s32 16, 16
      %105 = vsyncadd [#allocation5], %s104
      %s107 = sshll.u32 [#allocation4], 4
      %s108 = int_to_ptr.vmem [resolvable:$true] %s107
      %110 = dma.vmem_to_hbm [thread:$0]  %s108, 16, %s3, [#allocation5]
    $region21: #{tpu_custom_call.1} parent=1 // pred_fallthru
      _
    // Predicated region
    $region22: #{tpu_custom_call.1} parent=1 // pred_check
      _
    $region23: #{tpu_custom_call.1} parent=1 // pred_check_branch
      %112 = sbr.rel (0) target = $region25
    $region24: #{tpu_custom_call.1} parent=1 // pred_region
      %113 = dma.done [#allocation3], 16
    $region25: #{tpu_custom_call.1} parent=1 // pred_fallthru
      _
    // Predicated region
    $region26: #{tpu_custom_call.1} parent=1 // pred_check
      _
    $region27: #{tpu_custom_call.1} parent=1 // pred_check_branch
      %115 = sbr.rel (0) target = $region29
    $region28: #{tpu_custom_call.1} parent=1 // pred_region
      %116 = dma.done [#allocation5], 16
    $region29: #{tpu_custom_call.1} parent=1 // pred_fallthru
      _
    %117 = vsyncpa [#allocation3], 1
    %118 = vsyncpa [#allocation5], 1

</llo_original>
